<compile_context>
chip_gen: v5e
topology: v5e:2x2
jax: 0.10.0
libtpu: 0.0.40
codegen_flags: <defaults>
</compile_context>

<pallas_src>
import jax
import jax.numpy as jnp
from jax.experimental import pallas as pl
from jax.experimental.pallas import tpu as pltpu


def _constant_input_kernel(const_ref, out_ref):
    # const_ref: (1, F) learned constant, resident in VMEM for the whole call.
    # out_ref:   (Bt, F) output block for this grid step.
    out_ref[...] = jnp.broadcast_to(const_ref[...], out_ref.shape)


def constant_input_forward(x, const_param):
    """Replicates ConstantInput.forward: const_param repeated over batch.

    x:           any array whose leading dim is the batch size (values unused)
    const_param: (1, C, H, W) learned constant
    """
    batch = x.shape[0]
    _, c, h, w = const_param.shape
    f = c * h * w

    # Lane-dense flatten of the constant: (1, C, H, W) -> (1, F).
    const_flat = const_param.reshape(1, f)
    row_bytes = f * jnp.dtype(const_param.dtype).itemsize

    # Batch-tile sizing: single grid step if the whole output block is small
    # (<= 8 MiB), otherwise ~2 MiB blocks with Bt a multiple of 8 so the
    # (8, 128) block constraint is satisfied (last dim is always the full F).
    if batch * row_bytes <= (8 << 20):
        bt = batch
    else:
        bt = max(8, ((2 << 20) // row_bytes) // 8 * 8)
        bt = min(bt, batch)

    grid = (pl.cdiv(batch, bt),)

    out_flat = pl.pallas_call(
        _constant_input_kernel,
        out_shape=jax.ShapeDtypeStruct((batch, f), const_param.dtype),
        grid=grid,
        in_specs=[
            # Whole constant resident in VMEM, no per-step pipelining.
            pl.BlockSpec(memory_space=pltpu.MemorySpace.VMEM),
        ],
        out_specs=pl.BlockSpec((bt, f), lambda i: (i, 0)),
        compiler_params=pltpu.CompilerParams(
            dimension_semantics=("parallel",),
        ),
    )(const_flat)

    return out_flat.reshape(batch, c, h, w)


if __name__ == "__main__":
    key = jax.random.PRNGKey(0)
    k_param, k_x = jax.random.split(key)

    in_chan = 4
    size = 16
    batch = 2

    # Deterministic "randn" init of the nn.Parameter (1, in_chan, size, size).
    const_param = jax.random.normal(
        k_param, (1, in_chan, size, size), dtype=jnp.float32
    )

    # x is only consulted for its batch dimension (values never read).
    x = jax.random.normal(k_x, (batch, in_chan, size, size), dtype=jnp.float32)

    out = constant_input_forward(x, const_param)
    out = jax.block_until_ready(out)

    # Reference check against plain-JAX broadcast (== torch repeat(batch,1,1,1)).
    ref = jnp.broadcast_to(const_param, (batch, in_chan, size, size))
    assert out.shape == (batch, in_chan, size, size)
    assert out.dtype == const_param.dtype
    assert jnp.array_equal(out, ref)

    print("KERNEL_OK")
</pallas_src>

<mosaic_0001>
module attributes {stable_mosaic.version = 11 : i64} {
  func.func @_constant_input_kernel(%arg0: i32, %arg1: memref<1x1024xf32, #tpu.memory_space<vmem>>, %arg2: memref<2x1024xf32, #tpu.memory_space<vmem>>) attributes {dimension_semantics = [#tpu.dimension_semantics<parallel>], iteration_bounds = array<i64: 1>, scalar_prefetch = 0 : i64, scratch_operands = 0 : i64, tpu.core_type = #tpu.core_type<tc>, window_params = [{pipeline_mode = #tpu.pipeline_mode<synchronous>, transform_indices = @transform_0, window_bounds = array<i64: 1, 1024>}, {transform_indices = @transform_1, window_bounds = array<i64: 2, 1024>}]} {
    %c0 = arith.constant 0 : index
    %c0_0 = arith.constant 0 : index
    %0 = vector.load %arg1[%c0, %c0_0] : memref<1x1024xf32, #tpu.memory_space<vmem>>, vector<1x1024xf32>
    %1 = vector.shape_cast %0 : vector<1x1024xf32> to vector<1x1024xf32>
    %2 = vector.broadcast %1 : vector<1x1024xf32> to vector<2x1024xf32>
    %c0_1 = arith.constant 0 : index
    %c0_2 = arith.constant 0 : index
    %3 = vector.load %arg2[%c0_1, %c0_2] : memref<2x1024xf32, #tpu.memory_space<vmem>>, vector<2x1024xf32>
    tpu.vector_store %arg2[%c0_1, %c0_2], %2 {strides = array<i32>} : memref<2x1024xf32, #tpu.memory_space<vmem>>, vector<2x1024xf32>,
    return
  }
  func.func @transform_0(%arg0: i32) -> (i32, i32) {
    %c0_i32 = arith.constant 0 : i32
    %c0_i32_0 = arith.constant 0 : i32
    %c0_i32_1 = arith.constant 0 : i32
    return %c0_i32, %c0_i32_0 : i32, i32
  }
  func.func @transform_1(%arg0: i32) -> (i32, i32) {
    %c0_i32 = arith.constant 0 : i32
    %c0_i32_0 = arith.constant 0 : i32
    return %arg0, %c0_i32 : i32, i32
  }
}

</mosaic_0001>

<llo_original>
// kernel: tpu_custom_call.1
$region0: #{tpu_custom_call.1}
  #allocation0 [shape = 'u32[]', space=smem, size = 0x4, offset = 0x4, fixed_abs, tag = 'smem constant byte address 0x4 - core index']
  #allocation1 [shape = 'u32[72,128]{1,0:T(1,128)}', space=vmem, size = 0x9000, scoped, tag = 'internal scratch']
  %s0 = inlined_call_operand.hbm [shape: f32[1,1024], index: 0, kind: input, shape index: {}]
  %s1 = inlined_call_operand.hbm [shape: f32[2,1024], index: 1, kind: output, shape index: {}]
  %s2 = sld [smem:[#allocation0]]
  $region18: #{tpu_custom_call.1} parent=0
    _
  %s4 = ssub.s32 1, %s2
  %s5 = scalar_select 0, %s4, %s2
  $region1: #{tpu_custom_call.1} parent=0
    #allocation2 [shape = 'u8[4096]{0}', space=vmem, size = 0x1000, scoped, tag = 'input window, operand 0, single buffered']
    #allocation3 [shape = 's32[1]{0}', space=sflag, size = 0x4, scoped, tag = 'scoped memory for tpu_custom_call.1']
    #allocation4 [shape = 's32[1]{0}', space=sflag, size = 0x4, scoped, tag = 'scoped memory for tpu_custom_call.1']
    #allocation5 [shape = 'u8[8192]{0}', space=vmem, size = 0x2000, scoped, tag = 'output window, operand 0, single buffered']
    %6 = vsyncpa [#allocation3], 0
    %7 = vsyncpa [#allocation4], 0
    // Predicated region
    $region2: #{tpu_custom_call.1} parent=1 // pred_check
      _
    $region3: #{tpu_custom_call.1} parent=1 // pred_check_branch
      %9 = sbr.rel (0) target = $region5
    $region4: #{tpu_custom_call.1} parent=1 // pred_region
      %11 = vsyncadd [#allocation3], 0
      %s13 = sshll.u32 %s0, 4
      %s14 = int_to_ptr.hbm [resolvable:$true] %s13
      %s15 = sshll.u32 [#allocation2], 4
      %s16 = int_to_ptr.vmem [resolvable:$true] %s15
      %18 = dma.hbm_to_vmem [thread:$0]  %s14, 128, %s16, [#allocation3]
    $region5: #{tpu_custom_call.1} parent=1 // pred_fallthru
      _
    // Predicated region
    $region6: #{tpu_custom_call.1} parent=1 // pred_check
      _
    $region7: #{tpu_custom_call.1} parent=1 // pred_check_branch
      %20 = sbr.rel (0) target = $region9
    $region8: #{tpu_custom_call.1} parent=1 // pred_region
      %22 = dma.done [#allocation3], 128
    $region9: #{tpu_custom_call.1} parent=1 // pred_fallthru
      _
    %v23 = vld [vmem:[#allocation2] sm:$0xff]
    %v25 = vperm.slane %v23, 0
    %v26 = vperm.slane %v23, 1
    %v27 = vperm.slane %v23, 2
    %v28 = vperm.slane %v23, 3
    %v29 = vperm.slane %v23, 4
    %v30 = vperm.slane %v23, 5
    %v31 = vperm.slane %v23, 6
    %v32 = vperm.slane %v23, 7
    %v33 = vrot.slane %v26, 6
    %v34 = vrot.slane %v27, 4
    %v35 = vrot.slane %v28, 2
    %v36 = vrot.slane %v30, 6
    %v37 = vrot.slane %v31, 4
    %v38 = vrot.slane %v32, 2
    %vm39 = vcmask 1041408
    %v40 = vsel %vm39, %v25, %v33
    %vm41 = vcmask 1045508
    %v42 = vsel %vm41, %v34, %v35
    %vm43 = vcmask 1043456
    %v44 = vsel %vm43, %v40, %v42
    %v45 = vsel %vm39, %v29, %v36
    %v46 = vsel %vm41, %v37, %v38
    %v47 = vsel %vm43, %v45, %v46
    %50 = vst [vmem:[#allocation5] sm:$0xff] %v44
    %51 = vst [vmem:[#allocation5 + $0x8] sm:$0xff] %v47
    // Predicated region
    $region10: #{tpu_custom_call.1} parent=1 // pred_check
      _
    $region11: #{tpu_custom_call.1} parent=1 // pred_check_branch
      %53 = sbr.rel (0) target = $region13
    $region12: #{tpu_custom_call.1} parent=1 // pred_region
      %55 = vsyncadd [#allocation4], 0
      %s57 = sshll.u32 [#allocation5], 4
      %s58 = int_to_ptr.vmem [resolvable:$true] %s57
      %s59 = sshll.u32 %s1, 4
      %s60 = int_to_ptr.hbm [resolvable:$true] %s59
      %62 = dma.vmem_to_hbm [thread:$0]  %s58, 256, %s60, [#allocation4]
    $region13: #{tpu_custom_call.1} parent=1 // pred_fallthru
      _
    // Predicated region
    $region14: #{tpu_custom_call.1} parent=1 // pred_check
      _
    $region15: #{tpu_custom_call.1} parent=1 // pred_check_branch
      %64 = sbr.rel (0) target = $region17
    $region16: #{tpu_custom_call.1} parent=1 // pred_region
      %66 = dma.done [#allocation4], 256
    $region17: #{tpu_custom_call.1} parent=1 // pred_fallthru
      _
    %67 = vsyncpa [#allocation3], 1
    %68 = vsyncpa [#allocation4], 1

</llo_original>
